<compile_context>
chip_gen: v5e
topology: v5e:2x2
jax: 0.10.0
libtpu: 0.0.40
codegen_flags: <defaults>
</compile_context>

<pallas_src>
import jax
import jax.numpy as jnp
from jax.experimental import pallas as pl
from jax.experimental.pallas import tpu as pltpu

IN_FEATURES = 21 * 3   # 63
HIDDEN = 128
CLASSES = 3


def _round_up(n, m):
    return ((n + m - 1) // m) * m


def gesture_kernel(x_ref, w1_ref, b1_ref, w2_ref, b2_ref, out_ref):
    # fc1: (HIDDEN, IN) @ (IN, TILE_B) -> (HIDDEN, TILE_B); bf16 MXU, f32 acc.
    h = jnp.dot(w1_ref[...], x_ref[...], preferred_element_type=jnp.float32)
    h = jnp.maximum(h + b1_ref[...], 0.0)

    # fc2: (CLASSES, HIDDEN) @ (HIDDEN, TILE_B) -> (CLASSES, TILE_B)
    logits = jnp.dot(w2_ref[...], h.astype(w2_ref.dtype),
                     preferred_element_type=jnp.float32) + b2_ref[...]

    # softmax over the class axis (axis 0 in this layout == torch dim=1)
    m = jnp.max(logits, axis=0, keepdims=True)
    e = jnp.exp(logits - m)
    denom = jnp.sum(e, axis=0, keepdims=True)
    out_ref[...] = (e * pl.reciprocal(denom, approx=True)).astype(out_ref.dtype)


def gesture_net(x, w1_t, b1, w2_t, b2, *, tile_b=1024):
    """Forward pass.

    x     : (B, 63) float32
    w1_t  : (128, 63)  (PyTorch Linear layout, ideally pre-cast to bf16)
    b1    : (128, 1) float32
    w2_t  : (3, 128)   (ideally pre-cast to bf16)
    b2    : (3, 1) float32
    returns (B, 3) float32 softmax probabilities.

    NOTE: for tiny B (a handful of rows) plain XLA fusion of the two matmuls
    is cheaper than any pallas_call; this kernel targets batched inference.
    """
    B = x.shape[0]
    tb = min(tile_b, _round_up(B, 128))
    B_pad = _round_up(B, tb)

    # batch-on-lane layout + bf16 input (halves HBM bytes for x); pad batch to
    # a multiple of the tile so every lane-dim block is a 128-multiple.
    x_t = jnp.pad(x.astype(jnp.bfloat16).T, ((0, 0), (0, B_pad - B)))

    grid = (B_pad // tb,)
    out_t = pl.pallas_call(
        gesture_kernel,
        out_shape=jax.ShapeDtypeStruct((CLASSES, B_pad), jnp.float32),
        grid_spec=pltpu.PrefetchScalarGridSpec(
            num_scalar_prefetch=0,
            grid=grid,
            in_specs=[
                pl.BlockSpec((IN_FEATURES, tb), lambda i: (0, i)),       # x tile
                pl.BlockSpec((HIDDEN, IN_FEATURES), lambda i: (0, 0)),   # W1 resident
                pl.BlockSpec((HIDDEN, 1), lambda i: (0, 0)),             # b1 resident
                pl.BlockSpec((CLASSES, HIDDEN), lambda i: (0, 0)),       # W2 resident
                pl.BlockSpec((CLASSES, 1), lambda i: (0, 0)),            # b2 resident
            ],
            out_specs=pl.BlockSpec((CLASSES, tb), lambda i: (0, i)),
        ),
        compiler_params=pltpu.CompilerParams(
            dimension_semantics=("parallel",),   # shard batch tiles across TCs (v7x)
        ),
    )(x_t, w1_t, b1, w2_t, b2)

    return out_t[:, :B].T


def init_params(key):
    """Deterministic synthetic init in PyTorch Linear layout: W is (out, in)."""
    k1, k2, k3, k4 = jax.random.split(key, 4)
    bound1 = 1.0 / float(jnp.sqrt(jnp.float32(IN_FEATURES)))
    bound2 = 1.0 / float(jnp.sqrt(jnp.float32(HIDDEN)))
    w1_t = jax.random.uniform(k1, (HIDDEN, IN_FEATURES), jnp.float32, -bound1, bound1)
    b1 = jax.random.uniform(k2, (HIDDEN, 1), jnp.float32, -bound1, bound1)
    w2_t = jax.random.uniform(k3, (CLASSES, HIDDEN), jnp.float32, -bound2, bound2)
    b2 = jax.random.uniform(k4, (CLASSES, 1), jnp.float32, -bound2, bound2)
    return w1_t, b1, w2_t, b2


def gesture_net_ref(x, w1_t, b1, w2_t, b2):
    h = jnp.maximum(x @ w1_t.T + b1[:, 0], 0.0)
    logits = h @ w2_t.T + b2[:, 0]
    return jax.nn.softmax(logits, axis=1)


if __name__ == "__main__":
    key = jax.random.PRNGKey(0)
    k_x, k_x2, k_params = jax.random.split(key, 3)

    w1_t, b1, w2_t, b2 = init_params(k_params)
    # pre-cast matmul operands to bf16 once (biases stay f32)
    w1_bf = w1_t.astype(jnp.bfloat16)
    w2_bf = w2_t.astype(jnp.bfloat16)

    # small batch (matches the spec's typical per-frame use)
    B = 2
    x = jax.random.normal(k_x, (B, IN_FEATURES), jnp.float32)
    out = jax.block_until_ready(gesture_net(x, w1_bf, b1, w2_bf, b2))
    ref = gesture_net_ref(x, w1_t, b1, w2_t, b2)
    assert out.shape == (B, CLASSES)
    assert jnp.allclose(out, ref, atol=2e-2, rtol=2e-2)
    assert jnp.allclose(jnp.sum(out, axis=1), 1.0, atol=5e-3)

    # larger, non-multiple-of-tile batch exercising the pipelined grid + padding path
    B2 = 300
    x2 = jax.random.normal(k_x2, (B2, IN_FEATURES), jnp.float32)
    out2 = jax.block_until_ready(gesture_net(x2, w1_bf, b1, w2_bf, b2, tile_b=128))
    ref2 = gesture_net_ref(x2, w1_t, b1, w2_t, b2)
    assert out2.shape == (B2, CLASSES)
    assert jnp.allclose(out2, ref2, atol=2e-2, rtol=2e-2)
    assert jnp.allclose(jnp.sum(out2, axis=1), 1.0, atol=5e-3)

    print("KERNEL_OK")
</pallas_src>

<mosaic_0001>
module attributes {stable_mosaic.version = 11 : i64} {
  func.func @gesture_kernel(%arg0: i32, %arg1: memref<63x128xbf16, #tpu.memory_space<vmem>>, %arg2: memref<128x63xbf16, #tpu.memory_space<vmem>>, %arg3: memref<128x1xf32, #tpu.memory_space<vmem>>, %arg4: memref<3x128xbf16, #tpu.memory_space<vmem>>, %arg5: memref<3x1xf32, #tpu.memory_space<vmem>>, %arg6: memref<3x128xf32, #tpu.memory_space<vmem>>) attributes {dimension_semantics = [#tpu.dimension_semantics<parallel>], iteration_bounds = array<i64: 1>, scalar_prefetch = 0 : i64, scratch_operands = 0 : i64, tpu.core_type = #tpu.core_type<tc>, window_params = [{transform_indices = @transform_0, window_bounds = array<i64: 63, 128>}, {pipeline_mode = #tpu.pipeline_mode<synchronous>, transform_indices = @transform_1, window_bounds = array<i64: 128, 63>}, {pipeline_mode = #tpu.pipeline_mode<synchronous>, transform_indices = @transform_2, window_bounds = array<i64: 128, 1>}, {pipeline_mode = #tpu.pipeline_mode<synchronous>, transform_indices = @transform_3, window_bounds = array<i64: 3, 128>}, {pipeline_mode = #tpu.pipeline_mode<synchronous>, transform_indices = @transform_4, window_bounds = array<i64: 3, 1>}, {transform_indices = @transform_5, window_bounds = array<i64: 3, 128>}]} {
    %c0 = arith.constant 0 : index
    %c0_0 = arith.constant 0 : index
    %0 = vector.load %arg2[%c0, %c0_0] : memref<128x63xbf16, #tpu.memory_space<vmem>>, vector<128x63xbf16>
    %c0_1 = arith.constant 0 : index
    %c0_2 = arith.constant 0 : index
    %1 = vector.load %arg1[%c0_1, %c0_2] : memref<63x128xbf16, #tpu.memory_space<vmem>>, vector<63x128xbf16>
    %cst = arith.constant dense<0.000000e+00> : vector<128x128xf32>
    %2 = tpu.matmul %0, %1, %cst {dimension_numbers = #tpu.dot_dimension_numbers<[1], [0], [0], [1], [0, 0, 1, 1], [], []>} : vector<128x63xbf16>, vector<63x128xbf16>, vector<128x128xf32> -> vector<128x128xf32>
    %c0_3 = arith.constant 0 : index
    %c0_4 = arith.constant 0 : index
    %3 = vector.load %arg3[%c0_3, %c0_4] : memref<128x1xf32, #tpu.memory_space<vmem>>, vector<128x1xf32>
    %4 = vector.broadcast %3 : vector<128x1xf32> to vector<128x128xf32>
    %5 = arith.addf %2, %4 : vector<128x128xf32>
    %cst_5 = arith.constant 0.000000e+00 : f32
    %6 = vector.broadcast %cst_5 : f32 to vector<128x128xf32>
    %7 = arith.maximumf %5, %6 : vector<128x128xf32>
    %c0_6 = arith.constant 0 : index
    %c0_7 = arith.constant 0 : index
    %8 = vector.load %arg4[%c0_6, %c0_7] : memref<3x128xbf16, #tpu.memory_space<vmem>>, vector<3x128xbf16>
    %9 = arith.truncf %7 : vector<128x128xf32> to vector<128x128xbf16>
    %cst_8 = arith.constant dense<0.000000e+00> : vector<3x128xf32>
    %10 = tpu.matmul %8, %9, %cst_8 {dimension_numbers = #tpu.dot_dimension_numbers<[1], [0], [0], [1], [0, 0, 1, 1], [], []>} : vector<3x128xbf16>, vector<128x128xbf16>, vector<3x128xf32> -> vector<3x128xf32>
    %c0_9 = arith.constant 0 : index
    %c0_10 = arith.constant 0 : index
    %11 = vector.load %arg5[%c0_9, %c0_10] : memref<3x1xf32, #tpu.memory_space<vmem>>, vector<3x1xf32>
    %12 = vector.broadcast %11 : vector<3x1xf32> to vector<3x128xf32>
    %13 = arith.addf %10, %12 : vector<3x128xf32>
    %cst_11 = arith.constant dense<0xFF800000> : vector<128xf32>
    %14 = vector.multi_reduction <maximumf>, %13, %cst_11 [0] : vector<3x128xf32> to vector<128xf32>
    %15 = vector.shape_cast %14 : vector<128xf32> to vector<1x128xf32>
    %16 = vector.broadcast %15 : vector<1x128xf32> to vector<3x128xf32>
    %17 = arith.subf %13, %16 : vector<3x128xf32>
    %18 = math.exp %17 : vector<3x128xf32>
    %cst_12 = arith.constant dense<0.000000e+00> : vector<128xf32>
    %19 = vector.multi_reduction <add>, %18, %cst_12 [0] : vector<3x128xf32> to vector<128xf32>
    %20 = vector.shape_cast %19 : vector<128xf32> to vector<1x128xf32>
    %21 = tpu.reciprocal %20 {approx = true} : vector<1x128xf32> -> vector<1x128xf32>
    %22 = vector.broadcast %21 : vector<1x128xf32> to vector<3x128xf32>
    %23 = arith.mulf %18, %22 : vector<3x128xf32>
    %c0_13 = arith.constant 0 : index
    %c0_14 = arith.constant 0 : index
    %24 = vector.load %arg6[%c0_13, %c0_14] : memref<3x128xf32, #tpu.memory_space<vmem>>, vector<3x128xf32>
    tpu.vector_store %arg6[%c0_13, %c0_14], %23 {strides = array<i32>} : memref<3x128xf32, #tpu.memory_space<vmem>>, vector<3x128xf32>,
    return
  }
  func.func @transform_0(%arg0: i32) -> (i32, i32) {
    %c0_i32 = arith.constant 0 : i32
    %c0_i32_0 = arith.constant 0 : i32
    return %c0_i32, %arg0 : i32, i32
  }
  func.func @transform_1(%arg0: i32) -> (i32, i32) {
    %c0_i32 = arith.constant 0 : i32
    %c0_i32_0 = arith.constant 0 : i32
    %c0_i32_1 = arith.constant 0 : i32
    return %c0_i32, %c0_i32_0 : i32, i32
  }
  func.func @transform_2(%arg0: i32) -> (i32, i32) {
    %c0_i32 = arith.constant 0 : i32
    %c0_i32_0 = arith.constant 0 : i32
    %c0_i32_1 = arith.constant 0 : i32
    return %c0_i32, %c0_i32_0 : i32, i32
  }
  func.func @transform_3(%arg0: i32) -> (i32, i32) {
    %c0_i32 = arith.constant 0 : i32
    %c0_i32_0 = arith.constant 0 : i32
    %c0_i32_1 = arith.constant 0 : i32
    return %c0_i32, %c0_i32_0 : i32, i32
  }
  func.func @transform_4(%arg0: i32) -> (i32, i32) {
    %c0_i32 = arith.constant 0 : i32
    %c0_i32_0 = arith.constant 0 : i32
    %c0_i32_1 = arith.constant 0 : i32
    return %c0_i32, %c0_i32_0 : i32, i32
  }
  func.func @transform_5(%arg0: i32) -> (i32, i32) {
    %c0_i32 = arith.constant 0 : i32
    %c0_i32_0 = arith.constant 0 : i32
    return %c0_i32, %arg0 : i32, i32
  }
}

</mosaic_0001>

<llo_original>
// kernel: tpu_custom_call.1
$region0: #{tpu_custom_call.1}
  #allocation0 [shape = 'u32[]', space=smem, size = 0x4, offset = 0x4, fixed_abs, tag = 'smem constant byte address 0x4 - core index']
  #allocation1 [shape = 'u32[72,128]{1,0:T(1,128)}', space=vmem, size = 0x9000, scoped, tag = 'internal scratch']
  %s0 = inlined_call_operand.vmem [shape: bf16[63,128], index: 0, kind: input, shape index: {}]
  %s1 = inlined_call_operand.vmem [shape: bf16[128,63], index: 1, kind: input, shape index: {}]
  %s2 = inlined_call_operand.vmem [shape: f32[128,1], index: 2, kind: input, shape index: {}]
  %s3 = inlined_call_operand.vmem [shape: bf16[3,128], index: 3, kind: input, shape index: {}]
  %s4 = inlined_call_operand.vmem [shape: f32[3,1], index: 4, kind: input, shape index: {}]
  %s5 = inlined_call_operand.hbm [shape: f32[3,128], index: 5, kind: output, shape index: {}]
  %s6 = sld [smem:[#allocation0]]
  $region30: #{tpu_custom_call.1} parent=0
    _
  %s8 = ssub.s32 1, %s6
  %s9 = scalar_select 0, %s8, %s6
  $region1: #{tpu_custom_call.1} parent=0
    #allocation2 [shape = 'u8[2048]{0}', space=vmem, size = 0x800, scoped, tag = 'output window, operand 0, single buffered']
    #allocation3 [shape = 's32[1]{0}', space=sflag, size = 0x4, scoped, tag = 'scoped memory for tpu_custom_call.1']
    %10 = vsyncpa [#allocation3], 0
    // Predicated region
    $region2: #{tpu_custom_call.1} parent=1 // pred_check
      _
    $region3: #{tpu_custom_call.1} parent=1 // pred_check_branch
      %12 = sbr.rel (0) target = $region5
    $region4: #{tpu_custom_call.1} parent=1 // pred_region
      _
    $region5: #{tpu_custom_call.1} parent=1 // pred_fallthru
      _
    // Predicated region
    $region6: #{tpu_custom_call.1} parent=1 // pred_check
      _
    $region7: #{tpu_custom_call.1} parent=1 // pred_check_branch
      %14 = sbr.rel (0) target = $region9
    $region8: #{tpu_custom_call.1} parent=1 // pred_region
      _
    $region9: #{tpu_custom_call.1} parent=1 // pred_fallthru
      _
    // Predicated region
    $region10: #{tpu_custom_call.1} parent=1 // pred_check
      _
    $region11: #{tpu_custom_call.1} parent=1 // pred_check_branch
      %16 = sbr.rel (0) target = $region13
    $region12: #{tpu_custom_call.1} parent=1 // pred_region
      _
    $region13: #{tpu_custom_call.1} parent=1 // pred_fallthru
      _
    // Predicated region
    $region14: #{tpu_custom_call.1} parent=1 // pred_check
      _
    $region15: #{tpu_custom_call.1} parent=1 // pred_check_branch
      %18 = sbr.rel (0) target = $region17
    $region16: #{tpu_custom_call.1} parent=1 // pred_region
      _
    $region17: #{tpu_custom_call.1} parent=1 // pred_fallthru
      _
    // Predicated region
    $region18: #{tpu_custom_call.1} parent=1 // pred_check
      _
    $region19: #{tpu_custom_call.1} parent=1 // pred_check_branch
      %20 = sbr.rel (0) target = $region21
    $region20: #{tpu_custom_call.1} parent=1 // pred_region
      _
    $region21: #{tpu_custom_call.1} parent=1 // pred_fallthru
      _
    %v22 = vld [vmem:[%s1] sm:$0xf]
    %v23 = vld [vmem:[%s1 + $0x4] sm:$0xf]
    %v24 = vld [vmem:[%s1 + $0x8] sm:$0xf]
    %v25 = vld [vmem:[%s1 + $0xc] sm:$0xf]
    %v26 = vld [vmem:[%s1 + $0x10] sm:$0xf]
    %v27 = vld [vmem:[%s1 + $0x14] sm:$0xf]
    %v28 = vld [vmem:[%s1 + $0x18] sm:$0xf]
    %v29 = vld [vmem:[%s1 + $0x1c] sm:$0xf]
    %v30 = vld [vmem:[%s1 + $0x20] sm:$0xf]
    %v31 = vld [vmem:[%s1 + $0x24] sm:$0xf]
    %v32 = vld [vmem:[%s1 + $0x28] sm:$0xf]
    %v33 = vld [vmem:[%s1 + $0x2c] sm:$0xf]
    %v34 = vld [vmem:[%s1 + $0x30] sm:$0xf]
    %v35 = vld [vmem:[%s1 + $0x34] sm:$0xf]
    %v36 = vld [vmem:[%s1 + $0x38] sm:$0xf]
    %v37 = vld [vmem:[%s1 + $0x3c] sm:$0xf]
    %v38 = vld [vmem:[%s0] sm:$0xf]
    %v39 = vld [vmem:[%s0 + $0x4] sm:$0xf]
    %v40 = vld [vmem:[%s0 + $0x8] sm:$0xf]
    %v41 = vld [vmem:[%s0 + $0xc] sm:$0xf]
    %v42 = vld [vmem:[%s0 + $0x10] sm:$0xf]
    %v43 = vld [vmem:[%s0 + $0x14] sm:$0xf]
    %v44 = vld [vmem:[%s0 + $0x18] sm:$0xf]
    %v45 = vld [vmem:[%s0 + $0x1c] sm:$0xf]
    %v46 = vld [vmem:[%s2] sm:$0xff]
    %v47 = vld [vmem:[%s2 + $0x8] sm:$0xff]
    %v48 = vld [vmem:[%s2 + $0x10] sm:$0xff]
    %v49 = vld [vmem:[%s2 + $0x18] sm:$0xff]
    %v50 = vld [vmem:[%s2 + $0x20] sm:$0xff]
    %v51 = vld [vmem:[%s2 + $0x28] sm:$0xff]
    %v52 = vld [vmem:[%s2 + $0x30] sm:$0xff]
    %v53 = vld [vmem:[%s2 + $0x38] sm:$0xff]
    %v54 = vld [vmem:[%s2 + $0x40] sm:$0xff]
    %v55 = vld [vmem:[%s2 + $0x48] sm:$0xff]
    %v56 = vld [vmem:[%s2 + $0x50] sm:$0xff]
    %v57 = vld [vmem:[%s2 + $0x58] sm:$0xff]
    %v58 = vld [vmem:[%s2 + $0x60] sm:$0xff]
    %v59 = vld [vmem:[%s2 + $0x68] sm:$0xff]
    %v60 = vld [vmem:[%s2 + $0x70] sm:$0xff]
    %v61 = vld [vmem:[%s2 + $0x78] sm:$0xff]
    %63 = vset.pattern.permute.xlu0 0
    %64 = vperm.xlu0 %63, %v46
    %v65 = vpop.permute.xlu0 %64
    %68 = vset.pattern.permute.xlu0 0
    %69 = vperm.xlu0 %68, %v47
    %v70 = vpop.permute.xlu0 %69
    %73 = vset.pattern.permute.xlu0 0
    %74 = vperm.xlu0 %73, %v48
    %v75 = vpop.permute.xlu0 %74
    %78 = vset.pattern.permute.xlu0 0
    %79 = vperm.xlu0 %78, %v49
    %v80 = vpop.permute.xlu0 %79
    %83 = vset.pattern.permute.xlu0 0
    %84 = vperm.xlu0 %83, %v50
    %v85 = vpop.permute.xlu0 %84
    %88 = vset.pattern.permute.xlu0 0
    %89 = vperm.xlu0 %88, %v51
    %v90 = vpop.permute.xlu0 %89
    %93 = vset.pattern.permute.xlu0 0
    %94 = vperm.xlu0 %93, %v52
    %v95 = vpop.permute.xlu0 %94
    %98 = vset.pattern.permute.xlu0 0
    %99 = vperm.xlu0 %98, %v53
    %v100 = vpop.permute.xlu0 %99
    %103 = vset.pattern.permute.xlu0 0
    %104 = vperm.xlu0 %103, %v54
    %v105 = vpop.permute.xlu0 %104
    %108 = vset.pattern.permute.xlu0 0
    %109 = vperm.xlu0 %108, %v55
    %v110 = vpop.permute.xlu0 %109
    %113 = vset.pattern.permute.xlu0 0
    %114 = vperm.xlu0 %113, %v56
    %v115 = vpop.permute.xlu0 %114
    %118 = vset.pattern.permute.xlu0 0
    %119 = vperm.xlu0 %118, %v57
    %v120 = vpop.permute.xlu0 %119
    %123 = vset.pattern.permute.xlu0 0
    %124 = vperm.xlu0 %123, %v58
    %v125 = vpop.permute.xlu0 %124
    %128 = vset.pattern.permute.xlu0 0
    %129 = vperm.xlu0 %128, %v59
    %v130 = vpop.permute.xlu0 %129
    %133 = vset.pattern.permute.xlu0 0
    %134 = vperm.xlu0 %133, %v60
    %v135 = vpop.permute.xlu0 %134
    %138 = vset.pattern.permute.xlu0 0
    %139 = vperm.xlu0 %138, %v61
    %v140 = vpop.permute.xlu0 %139
    %v158 = vunpack.c.l.b16 %v22
    %v159 = vunpack.c.l.b16 %v23
    %v160 = vunpack.c.l.b16 %v24
    %v161 = vunpack.c.l.b16 %v25
    %v162 = vunpack.c.l.b16 %v26
    %v163 = vunpack.c.l.b16 %v27
    %v164 = vunpack.c.l.b16 %v28
    %v165 = vunpack.c.l.b16 %v29
    %v166 = vunpack.c.l.b16 %v30
    %v167 = vunpack.c.l.b16 %v31
    %v168 = vunpack.c.l.b16 %v32
    %v169 = vunpack.c.l.b16 %v33
    %v170 = vunpack.c.l.b16 %v34
    %v171 = vunpack.c.l.b16 %v35
    %v172 = vunpack.c.l.b16 %v36
    %v173 = vunpack.c.l.b16 %v37
    %v174 = vpack.c.b16 %v159, %v158
    %v175 = vpack.c.b16 %v161, %v160
    %v176 = vpack.c.b16 %v163, %v162
    %v177 = vpack.c.b16 %v165, %v164
    %v178 = vpack.c.b16 %v167, %v166
    %v179 = vpack.c.b16 %v169, %v168
    %v180 = vpack.c.b16 %v171, %v170
    %v181 = vpack.c.b16 %v173, %v172
    %v190 = vunpack.c.l.b16 %v38
    %v191 = vunpack.c.l.b16 %v39
    %v192 = vunpack.c.l.b16 %v40
    %v193 = vunpack.c.l.b16 %v41
    %v194 = vunpack.c.l.b16 %v42
    %v195 = vunpack.c.l.b16 %v43
    %v196 = vunpack.c.l.b16 %v44
    %v197 = vunpack.c.l.b16 %v45
    %v198 = vpack.c.b16 %v191, %v190
    %v199 = vpack.c.b16 %v193, %v192
    %v200 = vpack.c.b16 %v195, %v194
    %v201 = vpack.c.b16 %v197, %v196
    %vm205 = vcmask 515072
    %v207 = vsel %vm205, %v174, 0
    %v210 = vsel %vm205, %v175, 0
    %v213 = vsel %vm205, %v176, 0
    %v216 = vsel %vm205, %v177, 0
    %v219 = vsel %vm205, %v178, 0
    %v222 = vsel %vm205, %v179, 0
    %v225 = vsel %vm205, %v180, 0
    %v228 = vsel %vm205, %v181, 0
    %vm230 = vcmask 1046528
    %vm231 = vcmask 1047552
    %v232 = vsel %vm230, 4294967295, 65535
    %v233 = vsel %vm231, %v232, 0
    %v235 = vand.u32 %v201, %v233
    %237 = vmatpush.bf16.msra.mxu0 0
    %238 = vmatpush.bf16.msra.mxu0 0
    %239 = vmatpush.bf16.msra.mxu0 0
    %240 = vmatpush.bf16.msra.mxu0 0
    %241 = vmatpush.bf16.msra.mxu0 %v235
    %242 = vmatpush.bf16.msra.mxu0 %v200
    %243 = vmatpush.bf16.msra.mxu0 %v199
    %244 = vmatpush.bf16.msra.mxu0 %v198
    %245 = vmatmul.bf16.gmra.mxu0 %v207
    %v246 = vpop.f32.mrf.mxu0
    %v247 = vadd.f32 %v65, %v246
    %v248 = vpop.f32.mrf.mxu0
    %v249 = vadd.f32 %v70, %v248
    %250 = vmatmul.bf16.gmra.mxu0 %v210
    %v251 = vpop.f32.mrf.mxu0
    %v252 = vadd.f32 %v75, %v251
    %v253 = vpop.f32.mrf.mxu0
    %v254 = vadd.f32 %v80, %v253
    %255 = vmatmul.bf16.gmra.mxu0 %v213
    %v256 = vpop.f32.mrf.mxu0
    %v257 = vadd.f32 %v85, %v256
    %v258 = vpop.f32.mrf.mxu0
    %v259 = vadd.f32 %v90, %v258
    %260 = vmatmul.bf16.gmra.mxu0 %v216
    %v261 = vpop.f32.mrf.mxu0
    %v262 = vadd.f32 %v95, %v261
    %v263 = vpop.f32.mrf.mxu0
    %v264 = vadd.f32 %v100, %v263
    %265 = vmatmul.bf16.gmra.mxu0 %v219
    %v266 = vpop.f32.mrf.mxu0
    %v267 = vadd.f32 %v105, %v266
    %v268 = vpop.f32.mrf.mxu0
    %v269 = vadd.f32 %v110, %v268
    %270 = vmatmul.bf16.gmra.mxu0 %v222
    %v271 = vpop.f32.mrf.mxu0
    %v272 = vadd.f32 %v115, %v271
    %v273 = vpop.f32.mrf.mxu0
    %v274 = vadd.f32 %v120, %v273
    %275 = vmatmul.bf16.gmra.mxu0 %v225
    %v276 = vpop.f32.mrf.mxu0
    %v277 = vadd.f32 %v125, %v276
    %v278 = vpop.f32.mrf.mxu0
    %v279 = vadd.f32 %v130, %v278
    %280 = vmatmul.bf16.gmra.mxu0 %v228
    %v281 = vpop.f32.mrf.mxu0
    %v282 = vadd.f32 %v135, %v281
    %v283 = vpop.f32.mrf.mxu0
    %v284 = vadd.f32 %v140, %v283
    %285 = vdwg.mxu0
    %v286 = vmax.f32 %v247, 0.0
    %v287 = vmax.f32 %v249, 0.0
    %v288 = vmax.f32 %v252, 0.0
    %v289 = vmax.f32 %v254, 0.0
    %v290 = vmax.f32 %v257, 0.0
    %v291 = vmax.f32 %v259, 0.0
    %v292 = vmax.f32 %v262, 0.0
    %v293 = vmax.f32 %v264, 0.0
    %v294 = vmax.f32 %v267, 0.0
    %v295 = vmax.f32 %v269, 0.0
    %v296 = vmax.f32 %v272, 0.0
    %v297 = vmax.f32 %v274, 0.0
    %v298 = vmax.f32 %v277, 0.0
    %v299 = vmax.f32 %v279, 0.0
    %v300 = vmax.f32 %v282, 0.0
    %v301 = vmax.f32 %v284, 0.0
    %v302 = vld [vmem:[%s3] sm:$0x3]
    %v303 = vpack.c.bf16 %v287, %v286
    %v304 = vpack.c.bf16 %v289, %v288
    %v305 = vpack.c.bf16 %v291, %v290
    %v306 = vpack.c.bf16 %v293, %v292
    %v307 = vpack.c.bf16 %v295, %v294
    %v308 = vpack.c.bf16 %v297, %v296
    %v309 = vpack.c.bf16 %v299, %v298
    %v310 = vpack.c.bf16 %v301, %v300
    %v311 = vld [vmem:[%s4] sm:$0x7]
    %313 = vset.pattern.permute.xlu0 0
    %314 = vperm.xlu0 %313, %v311
    %v315 = vpop.permute.xlu0 %314
    %317 = vmatpush.bf16.msra.mxu0 %v310
    %318 = vmatpush.bf16.msra.mxu0 %v309
    %319 = vmatpush.bf16.msra.mxu0 %v308
    %320 = vmatpush.bf16.msra.mxu0 %v307
    %321 = vmatpush.bf16.msra.mxu0 %v306
    %322 = vmatpush.bf16.msra.mxu0 %v305
    %323 = vmatpush.bf16.msra.mxu0 %v304
    %324 = vmatpush.bf16.msra.mxu0 %v303
    %325 = vmatmul.bf16.gmra.mxu0 %v302
    %v326 = vpop.f32.mrf.mxu0
    %v327 = vadd.f32 %v315, %v326
    %v328 = vpop.f32.mrf.mxu0
    %329 = vdwg.mxu0
    %vm330 = vcmask 1042432
    %v331 = vsel %vm330, %v327, -inf
    %v332 = vrot.slane %v331, 4
    %v333 = vmax.f32 %v331, %v332
    %v334 = vrot.slane %v333, 2
    %v335 = vmax.f32 %v333, %v334
    %v336 = vrot.slane %v335, 1
    %v337 = vmax.f32 %v335, %v336
    %v338 = vsub.f32 %v327, %v337
    %v339 = vmul.f32 %v338, 1.442695
    %v340 = vpow.pop %v339
    %v341 = vsel %vm330, %v340, 0.0
    %v342 = vrot.slane %v341, 4
    %v343 = vadd.f32 %v341, %v342
    %v344 = vrot.slane %v343, 2
    %v345 = vadd.f32 %v343, %v344
    %v346 = vrot.slane %v345, 1
    %v347 = vadd.f32 %v345, %v346
    %v348 = vrcp.pop %v347
    %v349 = vmul.f32 %v340, %v348
    %350 = vst [vmem:[#allocation2] sm:$0x7] %v349
    // Predicated region
    $region22: #{tpu_custom_call.1} parent=1 // pred_check
      _
    $region23: #{tpu_custom_call.1} parent=1 // pred_check_branch
      %352 = sbr.rel (0) target = $region25
    $region24: #{tpu_custom_call.1} parent=1 // pred_region
      %354 = vsyncadd [#allocation3], 0
      %s356 = sshll.u32 [#allocation2], 4
      %s357 = int_to_ptr.vmem [resolvable:$true] %s356
      %s358 = sshll.u32 %s5, 4
      %s359 = int_to_ptr.hbm [resolvable:$true] %s358
      %361 = dma.vmem_to_hbm [thread:$0]  %s357, 64, %s359, [#allocation3]
    $region25: #{tpu_custom_call.1} parent=1 // pred_fallthru
      _
    // Predicated region
    $region26: #{tpu_custom_call.1} parent=1 // pred_check
      _
    $region27: #{tpu_custom_call.1} parent=1 // pred_check_branch
      %363 = sbr.rel (0) target = $region29
    $region28: #{tpu_custom_call.1} parent=1 // pred_region
      %365 = dma.done [#allocation3], 64
    $region29: #{tpu_custom_call.1} parent=1 // pred_fallthru
      _
    %366 = vsyncpa [#allocation3], 1

</llo_original>
